<compile_context>
chip_gen: v7x
topology: tpu7x:2x2x1
jax: 0.10.0
libtpu: 0.0.40
codegen_flags: <defaults>
</compile_context>

<pallas_src>
import math

import jax
import jax.numpy as jnp
from jax import lax
from jax.experimental import pallas as pl
from jax.experimental.pallas import tpu as pltpu


def _round_up(x, m):
    return ((x + m - 1) // m) * m


def _qbert_output_kernel(eps):
    def kernel(x_ref, w_ref, aff_ref, res_ref, o_ref):
        # Single large MXU matmul: bf16 (or native) operands, f32 accumulation.
        h = jnp.dot(x_ref[...], w_ref[...], preferred_element_type=jnp.float32)

        # Packed affine params: row 0 = bias, row 1 = gamma, row 2 = beta.
        aff = aff_ref[...].astype(jnp.float32)
        h = h + aff[0:1, :]

        # Dropout is identity at inference time.
        # TODO(synk): training-mode dropout would use pltpu.prng_seed /
        #             pltpu.prng_random_bits to build a keep-mask here.
        h = h + res_ref[...].astype(jnp.float32)

        # One-pass LayerNorm stats over the hidden (lane) axis, clamped so
        # cancellation can never feed rsqrt a negative argument.
        inv_h = 1.0 / h.shape[-1]
        mean = jnp.sum(h, axis=-1, keepdims=True) * inv_h
        meansq = jnp.sum(h * h, axis=-1, keepdims=True) * inv_h
        var = jnp.maximum(meansq - mean * mean, 0.0)
        normed = (h - mean) * lax.rsqrt(var + eps)

        o_ref[...] = (normed * aff[1:2, :] + aff[2:3, :]).astype(o_ref.dtype)

    return kernel


def _build_block_weight(w):
    """w: [4, I/4, H/4] (r, i, j, k) -> W_block: [I, H] such that
    x @ W_block reproduces the Hamilton-product matrix form."""
    r, i, j, k = w[0], w[1], w[2], w[3]
    row_r = jnp.concatenate([r,   i,  j,  k], axis=1)
    row_i = jnp.concatenate([-i,  r, -k,  j], axis=1)
    row_j = jnp.concatenate([-j,  k,  r, -i], axis=1)
    row_k = jnp.concatenate([-k, -j,  i,  r], axis=1)
    return jnp.concatenate([row_r, row_i, row_j, row_k], axis=0)


def prepare_params(raw_params, *, mxu_dtype=jnp.bfloat16, param_dtype=jnp.float32):
    """Build kernel-ready params ONCE at weight-load time (not per call):
    the fused quaternion block weight (in the MXU dtype) and the packed
    (8, H) bias/gamma/beta slab (f32, sublane-padded)."""
    w_block = _build_block_weight(raw_params["w"]).astype(mxu_dtype)      # [I, H]
    H = raw_params["b"].shape[-1]
    affine = jnp.zeros((8, H), param_dtype)
    affine = affine.at[0].set(raw_params["b"][0].astype(param_dtype))
    affine = affine.at[1].set(raw_params["gamma"][0].astype(param_dtype))
    affine = affine.at[2].set(raw_params["beta"][0].astype(param_dtype))
    return {"w_block": w_block, "affine": affine}


def _pick_tm(n_rows, block_rows):
    """Row-tile size: lane/sublane-friendly, and >= 2 grid blocks whenever the
    problem is big enough (v7x megacore: 2 TensorCores share the grid)."""
    block_rows = max(8, (block_rows // 8) * 8)
    if n_rows > block_rows:
        return block_rows
    if n_rows <= 8:
        return n_rows                       # single tiny block; nothing to split
    # Split roughly in half (rounded to 8 sublanes, 128 when big) so the
    # "parallel" axis has at least 2 blocks.
    tm = _round_up(-(-n_rows // 2), 8)
    if n_rows > 256:
        tm = _round_up(tm, 128)
    return tm if tm < n_rows else n_rows


def qbert_output(hidden_states, input_tensor, prepared, *, eps=1e-12, block_rows=512):
    """hidden_states: [B, S, intermediate_size], input_tensor: [B, S, hidden_size].
    `prepared` = prepare_params(raw_params, ...)."""
    B, S, I = hidden_states.shape
    H = input_tensor.shape[-1]
    N = B * S

    w_block = prepared["w_block"]            # [I, H], MXU dtype (bf16 fast path)
    affine = prepared["affine"]              # [8, H], f32: bias / gamma / beta
    mxu_dtype = w_block.dtype
    out_dtype = hidden_states.dtype

    # Feed the MXU its native fast dtype (bf16); residual stays f32 for LN accuracy.
    x2d = hidden_states.reshape(N, I).astype(mxu_dtype)
    res2d = input_tensor.reshape(N, H)

    tm = _pick_tm(N, block_rows)
    grid = (pl.cdiv(N, tm),)

    # VMEM budget (double-buffered streamed tiles + single-buffered residents);
    # only raise the scoped limit when the tile actually needs the headroom.
    isz = lambda dt: jnp.dtype(dt).itemsize
    vmem_bytes = (2 * tm * I * isz(mxu_dtype)          # x tile (2 bufs)
                  + I * H * isz(mxu_dtype)             # W_block (Buffered(1))
                  + 8 * H * isz(affine.dtype)          # affine slab (Buffered(1))
                  + 2 * tm * H * isz(res2d.dtype)      # residual tile (2 bufs)
                  + 2 * tm * H * isz(out_dtype))       # output tile (2 bufs)
    vmem_limit = None
    if vmem_bytes > (28 << 20):
        vmem_limit = min(int(vmem_bytes * 1.25) + (4 << 20), 60 << 20)

    cost = pl.CostEstimate(
        flops=2 * N * I * H,
        transcendentals=0,
        bytes_accessed=(N * I * isz(mxu_dtype) + I * H * isz(mxu_dtype)
                        + N * H * isz(res2d.dtype) + N * H * isz(out_dtype)),
    )

    kernel = _qbert_output_kernel(eps)
    out2d = pl.pallas_call(
        kernel,
        out_shape=jax.ShapeDtypeStruct((N, H), out_dtype),
        grid_spec=pl.GridSpec(
            grid=grid,
            in_specs=[
                # Streamed per-tile operands (default double-buffered pipeline).
                pl.BlockSpec((tm, I), lambda i: (i, 0)),
                # Grid-invariant residents: single buffer, no wasted VMEM copy.
                pl.BlockSpec((I, H), lambda i: (0, 0),
                             pipeline_mode=pl.Buffered(1)),
                pl.BlockSpec((8, H), lambda i: (0, 0),
                             pipeline_mode=pl.Buffered(1)),
                pl.BlockSpec((tm, H), lambda i: (i, 0)),
            ],
            out_specs=pl.BlockSpec((tm, H), lambda i: (i, 0)),
        ),
        compiler_params=pltpu.CompilerParams(
            dimension_semantics=("parallel",),
            vmem_limit_bytes=vmem_limit),
        cost_estimate=cost,
    )(x2d, w_block, affine, res2d)

    return out2d.reshape(B, S, H)


def init_params(key, intermediate_size, hidden_size, dtype=jnp.float32):
    """Deterministic synthetic params matching QuaternionTransformation/LayerNorm shapes."""
    assert intermediate_size % 4 == 0 and hidden_size % 4 == 0
    I4 = intermediate_size // 4
    H4 = hidden_size // 4
    kw, kb = jax.random.split(key)
    # kaiming-uniform-like bound (a=sqrt(5)) for [I/4, H/4] weights
    bound_w = math.sqrt(6.0 / ((1 + 5.0) * I4))
    w = jax.random.uniform(kw, (4, I4, H4), dtype, minval=-bound_w, maxval=bound_w)
    bound_b = 1.0 / math.sqrt(I4)
    b = jax.random.uniform(kb, (1, 4 * H4), dtype, minval=-bound_b, maxval=bound_b)
    gamma = jnp.ones((1, hidden_size), dtype)   # nn.LayerNorm default weight
    beta = jnp.zeros((1, hidden_size), dtype)   # nn.LayerNorm default bias
    return {"w": w, "b": b, "gamma": gamma, "beta": beta}


def reference(hidden_states, input_tensor, params, *, eps=1e-12):
    """Pure-JAX f32 reference mirroring the PyTorch module (eval mode), using the
    original 16-matmul Hamilton-product formulation (verifies W_block signs)."""
    B, S, I = hidden_states.shape
    H = input_tensor.shape[-1]
    x = hidden_states.reshape(B * S, I)
    I4 = I // 4
    r1, i1, j1, k1 = (x[:, n * I4:(n + 1) * I4] for n in range(4))
    r2, i2, j2, k2 = params["w"]
    H4 = H // 4
    rb, ib, jb, kb = (params["b"][0, n * H4:(n + 1) * H4] for n in range(4))
    r = r1 @ r2 - i1 @ i2 - j1 @ j2 - k1 @ k2 + rb
    i = r1 @ i2 + i1 @ r2 + j1 @ k2 - k1 @ j2 + ib
    j = r1 @ j2 - i1 @ k2 + j1 @ r2 + k1 @ i2 + jb
    k = r1 @ k2 + i1 @ j2 - j1 @ i2 + k1 @ r2 + kb
    h = jnp.concatenate([r, i, j, k], axis=-1) + input_tensor.reshape(B * S, H)
    mean = jnp.mean(h, axis=-1, keepdims=True)
    var = jnp.mean(jnp.square(h - mean), axis=-1, keepdims=True)
    out = (h - mean) * lax.rsqrt(var + eps) * params["gamma"] + params["beta"]
    return out.reshape(B, S, H)


if __name__ == "__main__":
    # Small config: intermediate_size=64, hidden_size=32, batch=2, seq=8
    B, S = 2, 8
    intermediate_size, hidden_size = 64, 32
    eps = 1e-12

    key = jax.random.PRNGKey(0)
    k_x, k_res, k_p = jax.random.split(key, 3)
    hidden_states = jax.random.normal(k_x, (B, S, intermediate_size), jnp.float32)
    input_tensor = jax.random.normal(k_res, (B, S, hidden_size), jnp.float32)
    raw_params = init_params(k_p, intermediate_size, hidden_size)

    # Weight-load-time preparation (fused W_block in bf16, packed affine slab).
    prepared = prepare_params(raw_params, mxu_dtype=jnp.bfloat16,
                              param_dtype=jnp.float32)

    # block_rows=8 forces a multi-block (grid=(2,)) run even at toy shapes so the
    # tiled/pipelined path (and the Buffered(1) residents) are exercised; real
    # shapes use the default 512-row tiles.
    out = qbert_output(hidden_states, input_tensor, prepared, eps=eps, block_rows=8)
    out = jax.block_until_ready(out)

    ref = reference(hidden_states, input_tensor, raw_params, eps=eps)
    assert out.shape == (B, S, hidden_size)
    # bf16 MXU operands vs f32 reference: loosened tolerance (f32 accumulation
    # and f32 LayerNorm epilogue keep the error small).
    assert jnp.allclose(out, ref, atol=2e-2, rtol=2e-2), float(
        jnp.max(jnp.abs(out - ref)))

    print("KERNEL_OK")
</pallas_src>

<mosaic_0001>
module attributes {stable_mosaic.version = 11 : i64} {
  func.func @kernel(%arg0: i32, %arg1: memref<8x64xbf16, #tpu.memory_space<vmem>>, %arg2: memref<64x32xbf16, #tpu.memory_space<vmem>>, %arg3: memref<8x32xf32, #tpu.memory_space<vmem>>, %arg4: memref<8x32xf32, #tpu.memory_space<vmem>>, %arg5: memref<8x32xf32, #tpu.memory_space<vmem>>) attributes {dimension_semantics = [#tpu.dimension_semantics<parallel>], iteration_bounds = array<i64: 2>, scalar_prefetch = 0 : i64, scratch_operands = 0 : i64, tpu.core_type = #tpu.core_type<tc>, window_params = [{transform_indices = @transform_0, window_bounds = array<i64: 8, 64>}, {pipeline_mode = #tpu.pipeline_mode<synchronous>, transform_indices = @transform_1, window_bounds = array<i64: 64, 32>}, {pipeline_mode = #tpu.pipeline_mode<synchronous>, transform_indices = @transform_2, window_bounds = array<i64: 8, 32>}, {transform_indices = @transform_3, window_bounds = array<i64: 8, 32>}, {transform_indices = @transform_4, window_bounds = array<i64: 8, 32>}]} {
    %c0 = arith.constant 0 : index
    %c0_0 = arith.constant 0 : index
    %0 = vector.load %arg1[%c0, %c0_0] : memref<8x64xbf16, #tpu.memory_space<vmem>>, vector<8x64xbf16>
    %c0_1 = arith.constant 0 : index
    %c0_2 = arith.constant 0 : index
    %1 = vector.load %arg2[%c0_1, %c0_2] : memref<64x32xbf16, #tpu.memory_space<vmem>>, vector<64x32xbf16>
    %cst = arith.constant dense<0.000000e+00> : vector<8x32xf32>
    %2 = tpu.matmul %0, %1, %cst {dimension_numbers = #tpu.dot_dimension_numbers<[1], [0], [0], [1], [0, 0, 1, 1], [], []>} : vector<8x64xbf16>, vector<64x32xbf16>, vector<8x32xf32> -> vector<8x32xf32>
    %c0_3 = arith.constant 0 : index
    %c0_4 = arith.constant 0 : index
    %3 = vector.load %arg3[%c0_3, %c0_4] : memref<8x32xf32, #tpu.memory_space<vmem>>, vector<8x32xf32>
    %4 = vector.extract_strided_slice %3 {offsets = [0, 0], sizes = [1, 32], strides = [1, 1]} : vector<8x32xf32> to vector<1x32xf32>
    %5 = vector.broadcast %4 : vector<1x32xf32> to vector<8x32xf32>
    %6 = arith.addf %2, %5 : vector<8x32xf32>
    %c0_5 = arith.constant 0 : index
    %c0_6 = arith.constant 0 : index
    %7 = vector.load %arg4[%c0_5, %c0_6] : memref<8x32xf32, #tpu.memory_space<vmem>>, vector<8x32xf32>
    %8 = arith.addf %6, %7 : vector<8x32xf32>
    %cst_7 = arith.constant dense<0.000000e+00> : vector<8xf32>
    %9 = vector.multi_reduction <add>, %8, %cst_7 [1] : vector<8x32xf32> to vector<8xf32>
    %10 = vector.shape_cast %9 : vector<8xf32> to vector<8x1xf32>
    %cst_8 = arith.constant 3.125000e-02 : f32
    %11 = vector.broadcast %cst_8 : f32 to vector<8x1xf32>
    %12 = arith.mulf %10, %11 : vector<8x1xf32>
    %13 = arith.mulf %8, %8 : vector<8x32xf32>
    %cst_9 = arith.constant dense<0.000000e+00> : vector<8xf32>
    %14 = vector.multi_reduction <add>, %13, %cst_9 [1] : vector<8x32xf32> to vector<8xf32>
    %15 = vector.shape_cast %14 : vector<8xf32> to vector<8x1xf32>
    %cst_10 = arith.constant 3.125000e-02 : f32
    %16 = vector.broadcast %cst_10 : f32 to vector<8x1xf32>
    %17 = arith.mulf %15, %16 : vector<8x1xf32>
    %18 = arith.mulf %12, %12 : vector<8x1xf32>
    %19 = arith.subf %17, %18 : vector<8x1xf32>
    %cst_11 = arith.constant 0.000000e+00 : f32
    %20 = vector.broadcast %cst_11 : f32 to vector<8x1xf32>
    %21 = arith.maximumf %19, %20 : vector<8x1xf32>
    %22 = vector.broadcast %12 : vector<8x1xf32> to vector<8x32xf32>
    %23 = arith.subf %8, %22 : vector<8x32xf32>
    %cst_12 = arith.constant 9.99999996E-13 : f32
    %24 = vector.broadcast %cst_12 : f32 to vector<8x1xf32>
    %25 = arith.addf %21, %24 : vector<8x1xf32>
    %26 = math.rsqrt %25 : vector<8x1xf32>
    %27 = vector.broadcast %26 : vector<8x1xf32> to vector<8x32xf32>
    %28 = arith.mulf %23, %27 : vector<8x32xf32>
    %29 = vector.extract_strided_slice %3 {offsets = [1, 0], sizes = [1, 32], strides = [1, 1]} : vector<8x32xf32> to vector<1x32xf32>
    %30 = vector.broadcast %29 : vector<1x32xf32> to vector<8x32xf32>
    %31 = arith.mulf %28, %30 : vector<8x32xf32>
    %32 = vector.extract_strided_slice %3 {offsets = [2, 0], sizes = [1, 32], strides = [1, 1]} : vector<8x32xf32> to vector<1x32xf32>
    %33 = vector.broadcast %32 : vector<1x32xf32> to vector<8x32xf32>
    %34 = arith.addf %31, %33 : vector<8x32xf32>
    %c0_13 = arith.constant 0 : index
    %c0_14 = arith.constant 0 : index
    %35 = vector.load %arg5[%c0_13, %c0_14] : memref<8x32xf32, #tpu.memory_space<vmem>>, vector<8x32xf32>
    tpu.vector_store %arg5[%c0_13, %c0_14], %34 {strides = array<i32>} : memref<8x32xf32, #tpu.memory_space<vmem>>, vector<8x32xf32>,
    return
  }
  func.func @transform_0(%arg0: i32) -> (i32, i32) {
    %c0_i32 = arith.constant 0 : i32
    %c0_i32_0 = arith.constant 0 : i32
    return %arg0, %c0_i32 : i32, i32
  }
  func.func @transform_1(%arg0: i32) -> (i32, i32) {
    %c0_i32 = arith.constant 0 : i32
    %c0_i32_0 = arith.constant 0 : i32
    %c0_i32_1 = arith.constant 0 : i32
    return %c0_i32, %c0_i32_0 : i32, i32
  }
  func.func @transform_2(%arg0: i32) -> (i32, i32) {
    %c0_i32 = arith.constant 0 : i32
    %c0_i32_0 = arith.constant 0 : i32
    %c0_i32_1 = arith.constant 0 : i32
    return %c0_i32, %c0_i32_0 : i32, i32
  }
  func.func @transform_3(%arg0: i32) -> (i32, i32) {
    %c0_i32 = arith.constant 0 : i32
    %c0_i32_0 = arith.constant 0 : i32
    return %arg0, %c0_i32 : i32, i32
  }
  func.func @transform_4(%arg0: i32) -> (i32, i32) {
    %c0_i32 = arith.constant 0 : i32
    %c0_i32_0 = arith.constant 0 : i32
    return %arg0, %c0_i32 : i32, i32
  }
}

</mosaic_0001>

<llo_original>
// kernel: tpu_custom_call.1
$region0: #{tpu_custom_call.1}
  #allocation0 [shape = 'u32[]', space=smem, size = 0x4, offset = 0x4, fixed_abs, tag = 'smem constant byte address 0x4 - core index']
  #allocation1 [shape = 'u32[144,128]{1,0:T(1,128)}', space=vmem, size = 0x12000, scoped, tag = 'internal scratch']
  %s0 = inlined_call_operand.vmem [shape: bf16[16,64], index: 0, kind: input, shape index: {}]
  %s1 = inlined_call_operand.vmem [shape: bf16[64,32], index: 1, kind: input, shape index: {}]
  %s2 = inlined_call_operand.vmem [shape: f32[8,32], index: 2, kind: input, shape index: {}]
  %s3 = inlined_call_operand.vmem [shape: f32[16,32], index: 3, kind: input, shape index: {}]
  %s4 = inlined_call_operand.hbm [shape: f32[16,32], index: 4, kind: output, shape index: {}]
  %s5 = sld [smem:[#allocation0]]
  $region49: #{tpu_custom_call.1} parent=0
    _
  %s7 = ssub.s32 1, %s5
  %s8 = scalar_select 0, %s7, %s5
  $region1: #{tpu_custom_call.1} parent=0
    #allocation2 [shape = 'u8[8192]{0}', space=vmem, size = 0x2000, scoped, tag = 'output window, operand 0']
    #allocation3 [shape = 's32[2]{0}', space=sflag, size = 0x8, scoped, tag = 'scoped memory for tpu_custom_call.1']
    %9 = vsyncpa [#allocation3], 0
    %s10 = scalar_lea.sflag [#allocation3], 1
    %11 = vsyncpa %s10, 0
    loop: start=0, step=1, limit=4
    $region2: #{tpu_custom_call.1} parent=1 // loop_pre_header
      _
    $region3: #{tpu_custom_call.1} parent=1 // loop_header
      %s13 = sphi 0, %s17
      %p14 = scmp.ge.s32.totalorder %s13, 4
      %s23 = sphi 0, %s25
      %s26 = sphi 0, %s23
      %s27 = sphi 0, %s26
      %s43 = sphi 0, %s27
      %s47 = sphi 0, %s47
      %s49 = sphi 0, %s47
      %s50 = sphi 0, %s49
      %s64 = sphi 0, %s50
      %s68 = sphi 0, %s68
      %s70 = sphi 0, %s68
      %s71 = sphi 0, %s70
      %s85 = sphi 0, %s71
      %s91 = sphi 0, %s93
      %s94 = sphi 0, %s91
      %s95 = sphi 0, %s94
      %s111 = sphi 0, %s95
      %s117 = sphi 0, %s119
      %s120 = sphi 0, %s117
      %s121 = sphi 0, %s120
      %s137 = sphi 0, %s121
    $region4: #{tpu_custom_call.1} parent=1 // loop_header_branch
      %16 = sbr.rel (%p14) target = $region8
    $region5: #{tpu_custom_call.1} parent=1 // loop_body
      %s18 = ssub.s32 %s13, 1
      %s19 = ssub.s32 %s13, 2
      %s20 = sadd.s32 %s13, 1
      %s21 = ssub.s32 %s13, %s20
      %p22 = scmp.eq.s32.totalorder %s21, 0
      %s24 = sadd.s32 %s23, 1
      %s25 = scalar_select %p22, %s23, %s24
      %p28 = pneg %p22
      %p29 = scmp.eq.s32.totalorder %s13, 1
      %p30 = por %p28, %p29
      %p31 = scmp.ne.s32.totalorder %s23, %s26
      %p32 = scmp.eq.s32.totalorder %s13, 0
      %p33 = por %p31, %p32
      %p34 = scmp.ne.s32.totalorder %s23, %s26
      %p35 = scmp.eq.s32.totalorder %s18, 1
      %p36 = por %p34, %p35
      %p37 = scmp.ne.s32.totalorder %s26, %s27
      %p38 = scmp.eq.s32.totalorder %s18, 0
      %p39 = por %p37, %p38
      %p40 = scmp.ne.s32.totalorder %s26, %s27
      %p41 = scmp.eq.s32.totalorder %s19, 1
      %p42 = por %p40, %p41
      %p44 = scmp.ne.s32.totalorder %s27, %s43
      %p45 = scmp.eq.s32.totalorder %s19, 0
      %p46 = por %p44, %p45
      %s48 = sadd.s32 %s47, 1
      %p51 = scmp.eq.s32.totalorder %s13, 1
      %p52 = scmp.ne.s32.totalorder %s47, %s49
      %p53 = scmp.eq.s32.totalorder %s13, 0
      %p54 = por %p52, %p53
      %p55 = scmp.ne.s32.totalorder %s47, %s49
      %p56 = scmp.eq.s32.totalorder %s18, 1
      %p57 = por %p55, %p56
      %p58 = scmp.ne.s32.totalorder %s49, %s50
      %p59 = scmp.eq.s32.totalorder %s18, 0
      %p60 = por %p58, %p59
      %p61 = scmp.ne.s32.totalorder %s49, %s50
      %p62 = scmp.eq.s32.totalorder %s19, 1
      %p63 = por %p61, %p62
      %p65 = scmp.ne.s32.totalorder %s50, %s64
      %p66 = scmp.eq.s32.totalorder %s19, 0
      %p67 = por %p65, %p66
      %s69 = sadd.s32 %s68, 1
      %p72 = scmp.eq.s32.totalorder %s13, 1
      %p73 = scmp.ne.s32.totalorder %s68, %s70
      %p74 = scmp.eq.s32.totalorder %s13, 0
      %p75 = por %p73, %p74
      %p76 = scmp.ne.s32.totalorder %s68, %s70
      %p77 = scmp.eq.s32.totalorder %s18, 1
      %p78 = por %p76, %p77
      %p79 = scmp.ne.s32.totalorder %s70, %s71
      %p80 = scmp.eq.s32.totalorder %s18, 0
      %p81 = por %p79, %p80
      %p82 = scmp.ne.s32.totalorder %s70, %s71
      %p83 = scmp.eq.s32.totalorder %s19, 1
      %p84 = por %p82, %p83
      %p86 = scmp.ne.s32.totalorder %s71, %s85
      %p87 = scmp.eq.s32.totalorder %s19, 0
      %p88 = por %p86, %p87
      %s89 = ssub.s32 %s13, %s20
      %p90 = scmp.eq.s32.totalorder %s89, 0
      %s92 = sadd.s32 %s91, 1
      %s93 = scalar_select %p90, %s91, %s92
      %p96 = pneg %p90
      %p97 = scmp.eq.s32.totalorder %s13, 1
      %p98 = por %p96, %p97
      %p99 = scmp.ne.s32.totalorder %s91, %s94
      %p100 = scmp.eq.s32.totalorder %s13, 0
      %p101 = por %p99, %p100
      %p102 = scmp.ne.s32.totalorder %s91, %s94
      %p103 = scmp.eq.s32.totalorder %s18, 1
      %p104 = por %p102, %p103
      %p105 = scmp.ne.s32.totalorder %s94, %s95
      %p106 = scmp.eq.s32.totalorder %s18, 0
      %p107 = por %p105, %p106
      %p108 = scmp.ne.s32.totalorder %s94, %s95
      %p109 = scmp.eq.s32.totalorder %s19, 1
      %p110 = por %p108, %p109
      %p112 = scmp.ne.s32.totalorder %s95, %s111
      %p113 = scmp.eq.s32.totalorder %s19, 0
      %p114 = por %p112, %p113
      %s115 = ssub.s32 %s13, %s20
      %p116 = scmp.eq.s32.totalorder %s115, 0
      %s118 = sadd.s32 %s117, 1
      %s119 = scalar_select %p116, %s117, %s118
      %p122 = pneg %p116
      %p123 = scmp.eq.s32.totalorder %s13, 1
      %p124 = por %p122, %p123
      %p125 = scmp.ne.s32.totalorder %s117, %s120
      %p126 = scmp.eq.s32.totalorder %s13, 0
      %p127 = por %p125, %p126
      %p128 = scmp.ne.s32.totalorder %s117, %s120
      %p129 = scmp.eq.s32.totalorder %s18, 1
      %p130 = por %p128, %p129
      %p131 = scmp.ne.s32.totalorder %s120, %s121
      %p132 = scmp.eq.s32.totalorder %s18, 0
      %p133 = por %p131, %p132
      %p134 = scmp.ne.s32.totalorder %s120, %s121
      %p135 = scmp.eq.s32.totalorder %s19, 1
      %p136 = por %p134, %p135
      %p138 = scmp.ne.s32.totalorder %s121, %s137
      %p139 = scmp.eq.s32.totalorder %s19, 0
      %p140 = por %p138, %p139
      %p141 = scmp.le.s32.totalorder 1, %s13
      %p142 = scmp.lt.s32.totalorder %s13, 3
      %p143 = pnand %p141, %p142
      %p144 = pneg %p143
      // Predicated region
      $region9: #{tpu_custom_call.1} parent=5 // pred_check
        _
      $region10: #{tpu_custom_call.1} parent=5 // pred_check_branch
        %146 = sbr.rel (%p143) target = $region12
      $region11: #{tpu_custom_call.1} parent=5 // pred_region
        %s147 = ssub.s32 %s13, 1
        // Predicated region
        $region13: #{tpu_custom_call.1} parent=11 // pred_check
          %p148 = pneg %p60
        $region14: #{tpu_custom_call.1} parent=11 // pred_check_branch
          %150 = sbr.rel (%p148) target = $region16
        $region15: #{tpu_custom_call.1} parent=11 // pred_region
          _
        $region16: #{tpu_custom_call.1} parent=11 // pred_fallthru
          _
        // Predicated region
        $region17: #{tpu_custom_call.1} parent=11 // pred_check
          %p151 = pneg %p81
        $region18: #{tpu_custom_call.1} parent=11 // pred_check_branch
          %153 = sbr.rel (%p151) target = $region20
        $region19: #{tpu_custom_call.1} parent=11 // pred_region
          _
        $region20: #{tpu_custom_call.1} parent=11 // pred_fallthru
          _
      $region12: #{tpu_custom_call.1} parent=5 // pred_fallthru
        _
      %p154 = scmp.lt.s32.totalorder %s13, 2
      // Predicated region
      $region21: #{tpu_custom_call.1} parent=5 // pred_check
        %p155 = pneg %p154
      $region22: #{tpu_custom_call.1} parent=5 // pred_check_branch
        %157 = sbr.rel (%p155) target = $region24
      $region23: #{tpu_custom_call.1} parent=5 // pred_region
        // Predicated region
        $region25: #{tpu_custom_call.1} parent=23 // pred_check
          %p158 = pneg %p33
        $region26: #{tpu_custom_call.1} parent=23 // pred_check_branch
          %160 = sbr.rel (%p158) target = $region28
        $region27: #{tpu_custom_call.1} parent=23 // pred_region
          %p161 = scmp.lt.s32.totalorder %s13, 1
          %s162 = scalar_select %p161, %s13, 1
          %s163 = smul.addr %s162, 4
          %s164 = scalar_lea.vmem %s0, %s163
        $region28: #{tpu_custom_call.1} parent=23 // pred_fallthru
          _
        // Predicated region
        $region29: #{tpu_custom_call.1} parent=23 // pred_check
          %p165 = pneg %p101
        $region30: #{tpu_custom_call.1} parent=23 // pred_check_branch
          %167 = sbr.rel (%p165) target = $region32
        $region31: #{tpu_custom_call.1} parent=23 // pred_region
          %p168 = scmp.lt.s32.totalorder %s13, 1
          %s169 = scalar_select %p168, %s13, 1
          %s170 = smul.addr %s169, 8
          %s171 = scalar_lea.vmem %s3, %s170
        $region32: #{tpu_custom_call.1} parent=23 // pred_fallthru
          _
      $region24: #{tpu_custom_call.1} parent=5 // pred_fallthru
        _
      %p172 = scmp.le.s32.totalorder 1, %s13
      %p173 = scmp.lt.s32.totalorder %s13, 3
      %p174 = pnand %p172, %p173
      %p175 = pneg %p174
      // Predicated region
      $region33: #{tpu_custom_call.1} parent=5 // pred_check
        _
      $region34: #{tpu_custom_call.1} parent=5 // pred_check_branch
        %177 = sbr.rel (%p174) target = $region36
      $region35: #{tpu_custom_call.1} parent=5 // pred_region
        %s178 = ssub.s32 %s13, 1
        %p179 = scmp.lt.s32.totalorder %s18, 1
        %s180 = scalar_select %p179, %s18, 1
        %s181 = smul.addr %s180, 4
        %s182 = scalar_lea.vmem %s0, %s181
        %p183 = pneg %p39
        %p184 = pneg %p36
        %p185 = pneg %p60
        %p186 = pneg %p57
        %p187 = pneg %p81
        %p188 = pneg %p78
        %p189 = scmp.lt.s32.totalorder %s18, 1
        %s190 = scalar_select %p189, %s18, 1
        %s191 = smul.addr %s190, 8
        %s192 = scalar_lea.vmem %s3, %s191
        %p193 = pneg %p107
        %p194 = pneg %p104
        %p195 = pneg %p133
        %p196 = pneg %p130
        %s197 = sand.u32 %s120, 1
        %s198 = scalar_lea.sflag [#allocation3], %s197
        %s199 = sand.u32 %s120, 1
        %s200 = smul.addr %s199, 8
        %s201 = scalar_lea.vmem [#allocation2], %s200
        %p202 = scmp.lt.s32.totalorder %s18, 1
        %s203 = scalar_select %p202, %s18, 1
        %s204 = smul.addr %s203, 4
        %s205 = scalar_lea.vmem %s0, %s204
        %p206 = scmp.lt.s32.totalorder %s18, 1
        %s207 = scalar_select %p206, %s18, 1
        %s208 = smul.addr %s207, 8
        %s209 = scalar_lea.vmem %s3, %s208
        %v211 = vld [vmem:[%s205] sm:$0xf]
        %v212 = vld [vmem:[%s1] sm:$0xf]
        %v213 = vld [vmem:[%s1 + $0x4] sm:$0xf]
        %v214 = vld [vmem:[%s1 + $0x8] sm:$0xf]
        %v215 = vld [vmem:[%s1 + $0xc] sm:$0xf]
        %v216 = vld [vmem:[%s1 + $0x10] sm:$0xf]
        %v217 = vld [vmem:[%s1 + $0x14] sm:$0xf]
        %v218 = vld [vmem:[%s1 + $0x18] sm:$0xf]
        %v219 = vld [vmem:[%s1 + $0x1c] sm:$0xf]
        %v220 = vld [vmem:[%s2] sm:$0xff]
        %v221 = vlaneseq
        %v222 = vshrl.u32 %v221, 7
        %v223 = vsub.s32 0, %v222
        %v224 = vrot.slane %v220, %v223
        %v233 = vunpack.c.l.b16 %v212
        %v234 = vunpack.c.l.b16 %v213
        %v235 = vunpack.c.l.b16 %v214
        %v236 = vunpack.c.l.b16 %v215
        %v237 = vunpack.c.l.b16 %v216
        %v238 = vunpack.c.l.b16 %v217
        %v239 = vunpack.c.l.b16 %v218
        %v240 = vunpack.c.l.b16 %v219
        %v241 = vpack.c.b16 %v234, %v233
        %v242 = vpack.c.b16 %v236, %v235
        %v243 = vpack.c.b16 %v238, %v237
        %v244 = vpack.c.b16 %v240, %v239
        %vm249 = vcmask 523264
        %v251 = vsel %vm249, %v211, 0
        %253 = vmatprep.subr.bf16.mxu0 0
        %254 = vmatpush1.bf16.msra.mxu0 %v241
        %255 = vmatprep.subr.bf16.mxu0 0
        %256 = vmatpush1.bf16.msra.mxu0 %v242
        %257 = vmatprep.subr.bf16.mxu0 0
        %258 = vmatpush1.bf16.msra.mxu0 %v243
        %259 = vmatprep.subr.bf16.mxu0 0
        %260 = vmatpush1.bf16.msra.mxu0 %v244
        %261 = vmatprep.subr.bf16.mxu0 0
        %262 = vmatpush1.bf16.msra.mxu0 0
        %263 = vmatprep.subr.bf16.mxu0 0
        %264 = vmatpush1.bf16.msra.mxu0 0
        %265 = vmatprep.subr.bf16.mxu0 0
        %266 = vmatpush1.bf16.msra.mxu0 0
        %267 = vmatprep.subr.bf16.mxu0 0
        %268 = vmatpush1.bf16.msra.mxu0 0
        %269 = vmatprep.subr.bf16.mxu0 0
        %270 = vmatpush1.bf16.msra.mxu0 0
        %271 = vmatprep.subr.bf16.mxu0 0
        %272 = vmatpush1.bf16.msra.mxu0 0
        %273 = vmatprep.subr.bf16.mxu0 0
        %274 = vmatpush1.bf16.msra.mxu0 0
        %275 = vmatprep.subr.bf16.mxu0 0
        %276 = vmatpush1.bf16.msra.mxu0 0
        %277 = vmatprep.subr.bf16.mxu0 0
        %278 = vmatpush1.bf16.msra.mxu0 0
        %279 = vmatprep.subr.bf16.mxu0 0
        %280 = vmatpush1.bf16.msra.mxu0 0
        %281 = vmatprep.subr.bf16.mxu0 0
        %282 = vmatpush1.bf16.msra.mxu0 0
        %283 = vmatprep.subr.bf16.mxu0 0
        %284 = vmatpush1.bf16.msra.mxu0 0
        %285 = vmatprep.mubr.bf16.mxu0 0
        %286 = vmatmul.mubr.bf16.gmra.mrb[0].mxu0 %v251
        %v287 = vpop.f32.mrb[0].mxu0
        %v288 = vadd.f32 %v224, %v287
        %v289 = vpop.f32.mrb[0].mxu0
        %v290 = vpop.f32.mrb[0].mxu0
        %v291 = vpop.f32.mrb[0].mxu0
        %292 = vdwg.mxu0
        %v293 = vld [vmem:[%s209] sm:$0xff]
        %v294 = vadd.f32 %v288, %v293
        %vm295 = vcmask 261120
        %v296 = vsel %vm295, %v294, 0.0
        %297 = vadd.xlane.f32.xlu0 %v296
        %v298 = vpop.xlane.xlu0 %297
        %v299 = vmul.f32 %v298, 0.03125
        %v300 = vmul.f32 %v294, %v294
        %v301 = vsel %vm295, %v300, 0.0
        %302 = vadd.xlane.f32.xlu0 %v301
        %v303 = vpop.xlane.xlu0 %302
        %v304 = vmul.f32 %v303, 0.03125
        %v305 = vmul.f32 %v299, %v299
        %v306 = vsub.f32 %v304, %v305
        %v307 = vmax.f32 %v306, 0.0
        %v308 = vsub.f32 %v294, %v299
        %v309 = vadd.f32 %v307, 1e-12
        %v310 = vrsqrt.pop %v309
        %v311 = vmul.f32 %v308, %v310
        %v312 = vlaneseq
        %v313 = vshrl.u32 %v312, 7
        %v314 = vsub.s32 1, %v313
        %v315 = vrot.slane %v220, %v314
        %v316 = vmul.f32 %v311, %v315
        %v317 = vlaneseq
        %v318 = vshrl.u32 %v317, 7
        %v319 = vsub.s32 2, %v318
        %v320 = vrot.slane %v220, %v319
        %v321 = vadd.f32 %v316, %v320
        %322 = vst.msk [vmem:[%s201] sm:$0xff] %vm295, %v321
        %s323 = sand.u32 %s120, 1
        %s324 = scalar_lea.sflag [#allocation3], %s323
        %s325 = sand.u32 %s120, 1
        %s326 = smul.addr %s325, 8
        %s327 = scalar_lea.vmem [#allocation2], %s326
        // Predicated region
        $region37: #{tpu_custom_call.1} parent=35 // pred_check
          %p328 = pneg %p130
        $region38: #{tpu_custom_call.1} parent=35 // pred_check_branch
          %330 = sbr.rel (%p328) target = $region40
        $region39: #{tpu_custom_call.1} parent=35 // pred_region
          %s332 = ssub.s32 128, 128
          %333 = vsyncadd %s324, %s332
          %s334 = smul.addr %s18, 128
          %s335 = scalar_lea.hbm %s4, %s334
          %s337 = sshll.u32 %s327, 4
          %s338 = int_to_ptr.vmem [resolvable:$true] %s337
          %340 = dma.vmem_to_hbm [thread:$0]  %s338, 128, %s335, %s324
        $region40: #{tpu_custom_call.1} parent=35 // pred_fallthru
          _
      $region36: #{tpu_custom_call.1} parent=5 // pred_fallthru
        _
      %p341 = scmp.le.s32.totalorder 2, %s13
      // Predicated region
      $region41: #{tpu_custom_call.1} parent=5 // pred_check
        %p342 = pneg %p341
      $region42: #{tpu_custom_call.1} parent=5 // pred_check_branch
        %344 = sbr.rel (%p342) target = $region44
      $region43: #{tpu_custom_call.1} parent=5 // pred_region
        %s345 = ssub.s32 %s13, 2
        // Predicated region
        $region45: #{tpu_custom_call.1} parent=43 // pred_check
          %p346 = pneg %p136
        $region46: #{tpu_custom_call.1} parent=43 // pred_check_branch
          %348 = sbr.rel (%p346) target = $region48
        $region47: #{tpu_custom_call.1} parent=43 // pred_region
          %s349 = sand.u32 %s121, 1
          %s350 = scalar_lea.sflag [#allocation3], %s349
          %s351 = sand.u32 %s121, 1
          %s352 = smul.addr %s351, 8
          %s353 = scalar_lea.vmem [#allocation2], %s352
          %354 = dma.done %s350, 128
        $region48: #{tpu_custom_call.1} parent=43 // pred_fallthru
          _
      $region44: #{tpu_custom_call.1} parent=5 // pred_fallthru
        _
    $region6: #{tpu_custom_call.1} parent=1 // loop_footer
      %s17 = sadd.s32 1, %s13
    $region7: #{tpu_custom_call.1} parent=1 // loop_footer_branch
      %12 = sbr.rel target = $region3
    $region8: #{tpu_custom_call.1} parent=1 // loop_exit
      _
    %355 = vsyncpa [#allocation3], 1
    %s356 = scalar_lea.sflag [#allocation3], 1
    %357 = vsyncpa %s356, 1

</llo_original>
